<compile_context>
chip_gen: v7x
topology: tpu7x:2x2x1
jax: 0.10.0
libtpu: 0.0.40
codegen_flags: <defaults>
</compile_context>

<pallas_src>
import functools

import jax
import jax.numpy as jnp
from jax.experimental import pallas as pl
from jax.experimental.pallas import tpu as pltpu

_LANE = 128  # lane width: make the stored output a dense multiple of this


def _fused_sage_kernel(adj1_ref, adj2_ref, x_ref, w1_ref, b1_ref, w2_ref,
                       b2_ref, o_ref, *, num_dst1, num_dst2, h_feats, c_pad):
    """conv1 (mean SAGE) + ReLU + conv2 (mean SAGE), fully fused.

    Per layer:  out = A @ (X @ Wn) + X[:num_dst] @ Ws + b
    with Wn/Ws concatenated column-wise so each layer does a single activation
    matmul Y = X @ [Wn | Ws], then one aggregation matmul A @ Y[:, :out].
    All operands are whole-array VMEM blocks; h stays in VMEM.
    """
    x = x_ref[...]

    # ---- layer 1: in_feats -> h_feats, + ReLU ----
    y1 = jnp.dot(x, w1_ref[...], preferred_element_type=jnp.float32)
    neigh1 = jnp.dot(adj1_ref[...], y1[:, :h_feats],
                     preferred_element_type=jnp.float32)
    h = neigh1 + y1[:num_dst1, h_feats:2 * h_feats] + b1_ref[...]
    h = jnp.maximum(h, 0.0)

    # ---- layer 2: h_feats -> num_classes (columns padded to c_pad lanes) ----
    y2 = jnp.dot(h, w2_ref[...], preferred_element_type=jnp.float32)
    neigh2 = jnp.dot(adj2_ref[...], y2[:, :c_pad],
                     preferred_element_type=jnp.float32)
    out = neigh2 + y2[:num_dst2, c_pad:2 * c_pad] + b2_ref[...]

    # lane-dense (c_pad == 128) unmasked store
    o_ref[...] = out.astype(o_ref.dtype)


def model_forward(params, adj1, adj2, x, num_dst1, num_dst2):
    """Equivalent of Model.forward(mfgs, x) with dense mean-aggregation blocks."""
    h_feats = params["w_neigh1"].shape[1]
    num_classes = params["w_neigh2"].shape[1]
    c_pad = max(_LANE, num_classes)

    # Pack neigh/self weights into one RHS per layer (single activation matmul).
    w1 = jnp.concatenate([params["w_neigh1"], params["w_self1"]], axis=1)
    w1 = w1.astype(jnp.float32)
    b1 = params["b1"].reshape(1, h_feats).astype(jnp.float32)

    pad = c_pad - num_classes
    wn2 = jnp.pad(params["w_neigh2"].astype(jnp.float32), ((0, 0), (0, pad)))
    ws2 = jnp.pad(params["w_self2"].astype(jnp.float32), ((0, 0), (0, pad)))
    w2 = jnp.concatenate([wn2, ws2], axis=1)
    b2 = jnp.pad(params["b2"].astype(jnp.float32), (0, pad)).reshape(1, c_pad)

    kernel = functools.partial(
        _fused_sage_kernel,
        num_dst1=num_dst1, num_dst2=num_dst2,
        h_feats=h_feats, c_pad=c_pad)

    # Grid-less: every operand is a single whole-array block resident in VMEM
    # (block_shape == full array dims, so the (8,128) tiling rule is satisfied).
    out_pad = pl.pallas_call(
        kernel,
        out_shape=jax.ShapeDtypeStruct((num_dst2, c_pad), jnp.float32),
        in_specs=[
            pl.BlockSpec(adj1.shape, lambda: (0, 0)),
            pl.BlockSpec(adj2.shape, lambda: (0, 0)),
            pl.BlockSpec(x.shape, lambda: (0, 0)),
            pl.BlockSpec(w1.shape, lambda: (0, 0)),
            pl.BlockSpec(b1.shape, lambda: (0, 0)),
            pl.BlockSpec(w2.shape, lambda: (0, 0)),
            pl.BlockSpec(b2.shape, lambda: (0, 0)),
        ],
        out_specs=pl.BlockSpec((num_dst2, c_pad), lambda: (0, 0)),
        compiler_params=pltpu.CompilerParams(),
    )(adj1, adj2, x, w1, b1, w2, b2)

    # Drop the lane padding in the wrapper (cheap XLA slice).
    return out_pad[:, :num_classes]


def _reference_forward(params, adj1, adj2, x, num_dst1, num_dst2):
    """Pure-JAX reference for correctness checking."""
    h = (adj1 @ x) @ params["w_neigh1"] + x[:num_dst1] @ params["w_self1"] \
        + params["b1"]
    h = jnp.maximum(h, 0.0)
    out = (adj2 @ h) @ params["w_neigh2"] + h[:num_dst2] @ params["w_self2"] \
          + params["b2"]
    return out


def _make_mean_adj(key, num_dst, num_src, p=0.3):
    """Dense random bipartite block; rows normalized by in-degree (mean agg)."""
    edges = (jax.random.uniform(key, (num_dst, num_src)) < p).astype(jnp.float32)
    # ensure every dst node has at least one neighbor (self edge, DGL-block style)
    eye = jnp.zeros((num_dst, num_src)).at[jnp.arange(num_dst),
                                           jnp.arange(num_dst)].set(1.0)
    edges = jnp.maximum(edges, eye)
    deg = jnp.maximum(edges.sum(axis=1, keepdims=True), 1.0)
    return edges / deg


if __name__ == "__main__":
    # Small shapes implied by the module: in_feats, h_feats, num_classes.
    in_feats, h_feats, num_classes = 16, 32, 8
    num_src, num_dst1, num_dst2 = 64, 32, 16   # mfg[0]: 64->32, mfg[1]: 32->16

    key = jax.random.PRNGKey(0)
    keys = jax.random.split(key, 10)

    x = jax.random.normal(keys[0], (num_src, in_feats), dtype=jnp.float32)
    adj1 = _make_mean_adj(keys[1], num_dst1, num_src)
    adj2 = _make_mean_adj(keys[2], num_dst2, num_dst1)

    # Deterministic parameter init (Xavier-ish scaling), SAGEConv shapes:
    #   fc_neigh / fc_self: [in, out] (no bias), shared bias: [out]
    def _w(k, fan_in, fan_out):
        s = (2.0 / (fan_in + fan_out)) ** 0.5
        return s * jax.random.normal(k, (fan_in, fan_out), dtype=jnp.float32)

    params = {
        "w_neigh1": _w(keys[3], in_feats, h_feats),
        "w_self1":  _w(keys[4], in_feats, h_feats),
        "b1":       jnp.zeros((h_feats,), jnp.float32),
        "w_neigh2": _w(keys[5], h_feats, num_classes),
        "w_self2":  _w(keys[6], h_feats, num_classes),
        "b2":       jnp.zeros((num_classes,), jnp.float32),
    }

    out = model_forward(params, adj1, adj2, x, num_dst1, num_dst2)
    out = jax.block_until_ready(out)

    ref = _reference_forward(params, adj1, adj2, x, num_dst1, num_dst2)
    assert out.shape == (num_dst2, num_classes)
    # Kernel uses A @ (X @ W) contraction order (fewer padded MXU passes);
    # mathematically identical, tiny f32 reassociation difference.
    assert jnp.allclose(out, ref, atol=1e-3, rtol=1e-3), "mismatch vs reference"

    print("KERNEL_OK")
</pallas_src>

<mosaic_0001>
module attributes {stable_mosaic.version = 11 : i64} {
  func.func @_fused_sage_kernel(%arg0: memref<32x64xf32, #tpu.memory_space<vmem>>, %arg1: memref<16x32xf32, #tpu.memory_space<vmem>>, %arg2: memref<64x16xf32, #tpu.memory_space<vmem>>, %arg3: memref<16x64xf32, #tpu.memory_space<vmem>>, %arg4: memref<1x32xf32, #tpu.memory_space<vmem>>, %arg5: memref<32x256xf32, #tpu.memory_space<vmem>>, %arg6: memref<1x128xf32, #tpu.memory_space<vmem>>, %arg7: memref<16x128xf32, #tpu.memory_space<vmem>>) attributes {dimension_semantics = [], scalar_prefetch = 0 : i64, scratch_operands = 0 : i64, tpu.core_type = #tpu.core_type<tc>} {
    %c0 = arith.constant 0 : index
    %c0_0 = arith.constant 0 : index
    %0 = vector.load %arg2[%c0, %c0_0] : memref<64x16xf32, #tpu.memory_space<vmem>>, vector<64x16xf32>
    %c0_1 = arith.constant 0 : index
    %c0_2 = arith.constant 0 : index
    %1 = vector.load %arg3[%c0_1, %c0_2] : memref<16x64xf32, #tpu.memory_space<vmem>>, vector<16x64xf32>
    %cst = arith.constant dense<0.000000e+00> : vector<64x64xf32>
    %2 = tpu.matmul %0, %1, %cst {dimension_numbers = #tpu.dot_dimension_numbers<[1], [0], [0], [1], [0, 0, 1, 1], [], []>} : vector<64x16xf32>, vector<16x64xf32>, vector<64x64xf32> -> vector<64x64xf32>
    %c0_3 = arith.constant 0 : index
    %c0_4 = arith.constant 0 : index
    %3 = vector.load %arg0[%c0_3, %c0_4] : memref<32x64xf32, #tpu.memory_space<vmem>>, vector<32x64xf32>
    %4 = vector.extract_strided_slice %2 {offsets = [0, 0], sizes = [64, 32], strides = [1, 1]} : vector<64x64xf32> to vector<64x32xf32>
    %cst_5 = arith.constant dense<0.000000e+00> : vector<32x32xf32>
    %5 = tpu.matmul %3, %4, %cst_5 {dimension_numbers = #tpu.dot_dimension_numbers<[1], [0], [0], [1], [0, 0, 1, 1], [], []>} : vector<32x64xf32>, vector<64x32xf32>, vector<32x32xf32> -> vector<32x32xf32>
    %6 = vector.extract_strided_slice %2 {offsets = [0, 32], sizes = [32, 32], strides = [1, 1]} : vector<64x64xf32> to vector<32x32xf32>
    %7 = arith.addf %5, %6 : vector<32x32xf32>
    %c0_6 = arith.constant 0 : index
    %c0_7 = arith.constant 0 : index
    %8 = vector.load %arg4[%c0_6, %c0_7] : memref<1x32xf32, #tpu.memory_space<vmem>>, vector<1x32xf32>
    %9 = vector.broadcast %8 : vector<1x32xf32> to vector<32x32xf32>
    %10 = arith.addf %7, %9 : vector<32x32xf32>
    %cst_8 = arith.constant 0.000000e+00 : f32
    %11 = vector.broadcast %cst_8 : f32 to vector<32x32xf32>
    %12 = arith.maximumf %10, %11 : vector<32x32xf32>
    %c0_9 = arith.constant 0 : index
    %c0_10 = arith.constant 0 : index
    %13 = vector.load %arg5[%c0_9, %c0_10] : memref<32x256xf32, #tpu.memory_space<vmem>>, vector<32x256xf32>
    %cst_11 = arith.constant dense<0.000000e+00> : vector<32x256xf32>
    %14 = tpu.matmul %12, %13, %cst_11 {dimension_numbers = #tpu.dot_dimension_numbers<[1], [0], [0], [1], [0, 0, 1, 1], [], []>} : vector<32x32xf32>, vector<32x256xf32>, vector<32x256xf32> -> vector<32x256xf32>
    %c0_12 = arith.constant 0 : index
    %c0_13 = arith.constant 0 : index
    %15 = vector.load %arg1[%c0_12, %c0_13] : memref<16x32xf32, #tpu.memory_space<vmem>>, vector<16x32xf32>
    %16 = vector.extract_strided_slice %14 {offsets = [0, 0], sizes = [32, 128], strides = [1, 1]} : vector<32x256xf32> to vector<32x128xf32>
    %cst_14 = arith.constant dense<0.000000e+00> : vector<16x128xf32>
    %17 = tpu.matmul %15, %16, %cst_14 {dimension_numbers = #tpu.dot_dimension_numbers<[1], [0], [0], [1], [0, 0, 1, 1], [], []>} : vector<16x32xf32>, vector<32x128xf32>, vector<16x128xf32> -> vector<16x128xf32>
    %18 = vector.extract_strided_slice %14 {offsets = [0, 128], sizes = [16, 128], strides = [1, 1]} : vector<32x256xf32> to vector<16x128xf32>
    %19 = arith.addf %17, %18 : vector<16x128xf32>
    %c0_15 = arith.constant 0 : index
    %c0_16 = arith.constant 0 : index
    %20 = vector.load %arg6[%c0_15, %c0_16] : memref<1x128xf32, #tpu.memory_space<vmem>>, vector<1x128xf32>
    %21 = vector.broadcast %20 : vector<1x128xf32> to vector<16x128xf32>
    %22 = arith.addf %19, %21 : vector<16x128xf32>
    %c0_17 = arith.constant 0 : index
    %c0_18 = arith.constant 0 : index
    %23 = vector.load %arg7[%c0_17, %c0_18] : memref<16x128xf32, #tpu.memory_space<vmem>>, vector<16x128xf32>
    tpu.vector_store %arg7[%c0_17, %c0_18], %22 {strides = array<i32>} : memref<16x128xf32, #tpu.memory_space<vmem>>, vector<16x128xf32>,
    return
  }
}

</mosaic_0001>

<llo_original>
// kernel: tpu_custom_call.1
$region0: #{tpu_custom_call.1}
  #allocation0 [shape = 'u32[]', space=smem, size = 0x4, offset = 0x4, fixed_abs, tag = 'smem constant byte address 0x4 - core index']
  #allocation1 [shape = 'u32[144,128]{1,0:T(1,128)}', space=vmem, size = 0x12000, scoped, tag = 'internal scratch']
  %s0 = inlined_call_operand.vmem [shape: f32[32,64], index: 0, kind: input, shape index: {}]
  %s1 = inlined_call_operand.hbm [shape: f32[16,32], index: 1, kind: input, shape index: {}]
  %s2 = inlined_call_operand.vmem [shape: f32[64,16], index: 2, kind: input, shape index: {}]
  %s3 = inlined_call_operand.hbm [shape: f32[16,64], index: 3, kind: input, shape index: {}]
  %s4 = inlined_call_operand.vmem [shape: f32[1,32], index: 4, kind: input, shape index: {}]
  %s5 = inlined_call_operand.vmem [shape: f32[32,256], index: 5, kind: input, shape index: {}]
  %s6 = inlined_call_operand.vmem [shape: f32[1,128], index: 6, kind: input, shape index: {}]
  %s7 = inlined_call_operand.hbm [shape: f32[16,128], index: 7, kind: output, shape index: {}]
  %s8 = sld [smem:[#allocation0]]
  $region46: #{tpu_custom_call.1} parent=0
    _
  %s10 = ssub.s32 1, %s8
  %s11 = scalar_select 0, %s10, %s8
  $region1: #{tpu_custom_call.1} parent=0
    #allocation2 [shape = 'u8[8192]{0}', space=vmem, size = 0x2000, scoped, tag = 'input window, operand 1, single buffered']
    #allocation3 [shape = 's32[1]{0}', space=sflag, size = 0x4, scoped, tag = 'scoped memory for tpu_custom_call.1']
    #allocation4 [shape = 's32[1]{0}', space=sflag, size = 0x4, scoped, tag = 'scoped memory for tpu_custom_call.1']
    #allocation5 [shape = 'u8[8192]{0}', space=vmem, size = 0x2000, scoped, tag = 'input window, operand 3, single buffered']
    #allocation6 [shape = 's32[1]{0}', space=sflag, size = 0x4, scoped, tag = 'scoped memory for tpu_custom_call.1']
    #allocation7 [shape = 'u8[8192]{0}', space=vmem, size = 0x2000, scoped, tag = 'output window, operand 0, single buffered']
    %12 = vsyncpa [#allocation3], 0
    %13 = vsyncpa [#allocation6], 0
    %14 = vsyncpa [#allocation4], 0
    // Predicated region
    $region2: #{tpu_custom_call.1} parent=1 // pred_check
      _
    $region3: #{tpu_custom_call.1} parent=1 // pred_check_branch
      %16 = sbr.rel (0) target = $region5
    $region4: #{tpu_custom_call.1} parent=1 // pred_region
      _
    $region5: #{tpu_custom_call.1} parent=1 // pred_fallthru
      _
    // Predicated region
    $region6: #{tpu_custom_call.1} parent=1 // pred_check
      _
    $region7: #{tpu_custom_call.1} parent=1 // pred_check_branch
      %18 = sbr.rel (0) target = $region9
    $region8: #{tpu_custom_call.1} parent=1 // pred_region
      %s20 = ssub.s32 256, 256
      %21 = vsyncadd [#allocation3], %s20
      %s22 = sshll.u32 [#allocation2], 4
      %s23 = int_to_ptr.vmem [resolvable:$true] %s22
      %28 = dma.hbm_to_vmem [thread:$0]  %s1, 256, %s23, [#allocation3], 128, 128, 8
    $region9: #{tpu_custom_call.1} parent=1 // pred_fallthru
      _
    // Predicated region
    $region10: #{tpu_custom_call.1} parent=1 // pred_check
      _
    $region11: #{tpu_custom_call.1} parent=1 // pred_check_branch
      %30 = sbr.rel (0) target = $region13
    $region12: #{tpu_custom_call.1} parent=1 // pred_region
      _
    $region13: #{tpu_custom_call.1} parent=1 // pred_fallthru
      _
    // Predicated region
    $region14: #{tpu_custom_call.1} parent=1 // pred_check
      _
    $region15: #{tpu_custom_call.1} parent=1 // pred_check_branch
      %32 = sbr.rel (0) target = $region17
    $region16: #{tpu_custom_call.1} parent=1 // pred_region
      %s34 = ssub.s32 256, 256
      %35 = vsyncadd [#allocation6], %s34
      %s36 = sshll.u32 [#allocation5], 4
      %s37 = int_to_ptr.vmem [resolvable:$true] %s36
      %42 = dma.hbm_to_vmem [thread:$0]  %s3, 256, %s37, [#allocation6], 128, 128, 8
    $region17: #{tpu_custom_call.1} parent=1 // pred_fallthru
      _
    // Predicated region
    $region18: #{tpu_custom_call.1} parent=1 // pred_check
      _
    $region19: #{tpu_custom_call.1} parent=1 // pred_check_branch
      %44 = sbr.rel (0) target = $region21
    $region20: #{tpu_custom_call.1} parent=1 // pred_region
      _
    $region21: #{tpu_custom_call.1} parent=1 // pred_fallthru
      _
    // Predicated region
    $region22: #{tpu_custom_call.1} parent=1 // pred_check
      _
    $region23: #{tpu_custom_call.1} parent=1 // pred_check_branch
      %46 = sbr.rel (0) target = $region25
    $region24: #{tpu_custom_call.1} parent=1 // pred_region
      _
    $region25: #{tpu_custom_call.1} parent=1 // pred_fallthru
      _
    // Predicated region
    $region26: #{tpu_custom_call.1} parent=1 // pred_check
      _
    $region27: #{tpu_custom_call.1} parent=1 // pred_check_branch
      %48 = sbr.rel (0) target = $region29
    $region28: #{tpu_custom_call.1} parent=1 // pred_region
      _
    $region29: #{tpu_custom_call.1} parent=1 // pred_fallthru
      _
    // Predicated region
    $region30: #{tpu_custom_call.1} parent=1 // pred_check
      _
    $region31: #{tpu_custom_call.1} parent=1 // pred_check_branch
      %50 = sbr.rel (0) target = $region33
    $region32: #{tpu_custom_call.1} parent=1 // pred_region
      %51 = dma.done [#allocation3], 256
    $region33: #{tpu_custom_call.1} parent=1 // pred_fallthru
      _
    // Predicated region
    $region34: #{tpu_custom_call.1} parent=1 // pred_check
      _
    $region35: #{tpu_custom_call.1} parent=1 // pred_check_branch
      %53 = sbr.rel (0) target = $region37
    $region36: #{tpu_custom_call.1} parent=1 // pred_region
      %54 = dma.done [#allocation6], 256
    $region37: #{tpu_custom_call.1} parent=1 // pred_fallthru
      _
    %v55 = vld [vmem:[%s2] sm:$0xff]
    %v56 = vld [vmem:[%s2 + $0x8] sm:$0xff]
    %v57 = vld [vmem:[%s2 + $0x10] sm:$0xff]
    %v58 = vld [vmem:[%s2 + $0x18] sm:$0xff]
    %v59 = vld [vmem:[%s2 + $0x20] sm:$0xff]
    %v60 = vld [vmem:[%s2 + $0x28] sm:$0xff]
    %v61 = vld [vmem:[%s2 + $0x30] sm:$0xff]
    %v62 = vld [vmem:[%s2 + $0x38] sm:$0xff]
    %v63 = vld [vmem:[#allocation5] sm:$0xff]
    %v64 = vld [vmem:[#allocation5 + $0x8] sm:$0xff]
    %vm65 = vcmask 130048
    %v67 = vsel %vm65, %v55, 0
    %v70 = vsel %vm65, %v56, 0
    %v73 = vsel %vm65, %v57, 0
    %v76 = vsel %vm65, %v58, 0
    %v79 = vsel %vm65, %v59, 0
    %v82 = vsel %vm65, %v60, 0
    %v85 = vsel %vm65, %v61, 0
    %v88 = vsel %vm65, %v62, 0
    %90 = vmatprep.subr.mxu0 0.0
    %91 = vmatpush1.msra.mxu0 %v63
    %92 = vmatprep.subr.mxu0 0.0
    %93 = vmatpush1.msra.mxu0 %v64
    %94 = vmatprep.subr.mxu0 0.0
    %95 = vmatpush1.msra.mxu0 0.0
    %96 = vmatprep.subr.mxu0 0.0
    %97 = vmatpush1.msra.mxu0 0.0
    %98 = vmatprep.subr.mxu0 0.0
    %99 = vmatpush1.msra.mxu0 0.0
    %100 = vmatprep.subr.mxu0 0.0
    %101 = vmatpush1.msra.mxu0 0.0
    %102 = vmatprep.subr.mxu0 0.0
    %103 = vmatpush1.msra.mxu0 0.0
    %104 = vmatprep.subr.mxu0 0.0
    %105 = vmatpush1.msra.mxu0 0.0
    %106 = vmatprep.subr.mxu0 0.0
    %107 = vmatpush1.msra.mxu0 0.0
    %108 = vmatprep.subr.mxu0 0.0
    %109 = vmatpush1.msra.mxu0 0.0
    %110 = vmatprep.subr.mxu0 0.0
    %111 = vmatpush1.msra.mxu0 0.0
    %112 = vmatprep.subr.mxu0 0.0
    %113 = vmatpush1.msra.mxu0 0.0
    %114 = vmatprep.subr.mxu0 0.0
    %115 = vmatpush1.msra.mxu0 0.0
    %116 = vmatprep.subr.mxu0 0.0
    %117 = vmatpush1.msra.mxu0 0.0
    %118 = vmatprep.subr.mxu0 0.0
    %119 = vmatpush1.msra.mxu0 0.0
    %120 = vmatprep.subr.mxu0 0.0
    %121 = vmatpush1.msra.mxu0 0.0
    %122 = vmatprep.subr.mxu0 0.0
    %123 = vmatpush1.msra.mxu0 0.0
    %124 = vmatprep.subr.mxu0 0.0
    %125 = vmatpush1.msra.mxu0 0.0
    %126 = vmatprep.subr.mxu0 0.0
    %127 = vmatpush1.msra.mxu0 0.0
    %128 = vmatprep.subr.mxu0 0.0
    %129 = vmatpush1.msra.mxu0 0.0
    %130 = vmatprep.subr.mxu0 0.0
    %131 = vmatpush1.msra.mxu0 0.0
    %132 = vmatprep.subr.mxu0 0.0
    %133 = vmatpush1.msra.mxu0 0.0
    %134 = vmatprep.subr.mxu0 0.0
    %135 = vmatpush1.msra.mxu0 0.0
    %136 = vmatprep.subr.mxu0 0.0
    %137 = vmatpush1.msra.mxu0 0.0
    %138 = vmatprep.subr.mxu0 0.0
    %139 = vmatpush1.msra.mxu0 0.0
    %140 = vmatprep.subr.mxu0 0.0
    %141 = vmatpush1.msra.mxu0 0.0
    %142 = vmatprep.subr.mxu0 0.0
    %143 = vmatpush1.msra.mxu0 0.0
    %144 = vmatprep.subr.mxu0 0.0
    %145 = vmatpush1.msra.mxu0 0.0
    %146 = vmatprep.subr.mxu0 0.0
    %147 = vmatpush1.msra.mxu0 0.0
    %148 = vmatprep.subr.mxu0 0.0
    %149 = vmatpush1.msra.mxu0 0.0
    %150 = vmatprep.subr.mxu0 0.0
    %151 = vmatpush1.msra.mxu0 0.0
    %152 = vmatprep.subr.mxu0 0.0
    %153 = vmatpush1.msra.mxu0 0.0
    %154 = vmatprep.mubr.f32.mxu0 0.0
    %155 = vmatmul.mubr.f32.gmra.mrb[0].mxu0 %v67
    %v156 = vpop.f32.mrb[0].mxu0
    %v157 = vadd.f32 0.0, %v156
    %v158 = vpop.f32.mrb[0].mxu0
    %159 = vmatprep.mubr.f32.mxu0 0.0
    %160 = vmatmul.mubr.f32.gmra.mrb[0].mxu0 %v70
    %v161 = vpop.f32.mrb[0].mxu0
    %v162 = vadd.f32 0.0, %v161
    %v163 = vpop.f32.mrb[0].mxu0
    %164 = vmatprep.mubr.f32.mxu0 0.0
    %165 = vmatmul.mubr.f32.gmra.mrb[0].mxu0 %v73
    %v166 = vpop.f32.mrb[0].mxu0
    %v167 = vadd.f32 0.0, %v166
    %v168 = vpop.f32.mrb[0].mxu0
    %169 = vmatprep.mubr.f32.mxu0 0.0
    %170 = vmatmul.mubr.f32.gmra.mrb[0].mxu0 %v76
    %v171 = vpop.f32.mrb[0].mxu0
    %v172 = vadd.f32 0.0, %v171
    %v173 = vpop.f32.mrb[0].mxu0
    %174 = vmatprep.mubr.f32.mxu0 0.0
    %175 = vmatmul.mubr.f32.gmra.mrb[0].mxu0 %v79
    %v176 = vpop.f32.mrb[0].mxu0
    %v177 = vadd.f32 0.0, %v176
    %v178 = vpop.f32.mrb[0].mxu0
    %179 = vmatprep.mubr.f32.mxu0 0.0
    %180 = vmatmul.mubr.f32.gmra.mrb[0].mxu0 %v82
    %v181 = vpop.f32.mrb[0].mxu0
    %v182 = vadd.f32 0.0, %v181
    %v183 = vpop.f32.mrb[0].mxu0
    %184 = vmatprep.mubr.f32.mxu0 0.0
    %185 = vmatmul.mubr.f32.gmra.mrb[0].mxu0 %v85
    %v186 = vpop.f32.mrb[0].mxu0
    %v187 = vadd.f32 0.0, %v186
    %v188 = vpop.f32.mrb[0].mxu0
    %189 = vmatprep.mubr.f32.mxu0 0.0
    %190 = vmatmul.mubr.f32.gmra.mrb[0].mxu0 %v88
    %v191 = vpop.f32.mrb[0].mxu0
    %v192 = vadd.f32 0.0, %v191
    %v193 = vpop.f32.mrb[0].mxu0
    %194 = vdwg.mxu0
    %v195 = vld [vmem:[%s0] sm:$0xff]
    %v196 = vld [vmem:[%s0 + $0x8] sm:$0xff]
    %v197 = vld [vmem:[%s0 + $0x10] sm:$0xff]
    %v198 = vld [vmem:[%s0 + $0x18] sm:$0xff]
    %203 = vrot.lane.b32.xlu0 %v157, 96
    %v204 = vpop.permute.xlu0 %203
    %205 = vrot.lane.b32.xlu0 %v162, 96
    %v206 = vpop.permute.xlu0 %205
    %207 = vrot.lane.b32.xlu0 %v167, 96
    %v208 = vpop.permute.xlu0 %207
    %209 = vrot.lane.b32.xlu0 %v172, 96
    %v210 = vpop.permute.xlu0 %209
    %vm215 = vcmask 523264
    %v217 = vsel %vm215, %v195, 0
    %v220 = vsel %vm215, %v196, 0
    %v223 = vsel %vm215, %v197, 0
    %v226 = vsel %vm215, %v198, 0
    %228 = vmatprep.subr.mxu0 0.0
    %229 = vmatpush1.msra.mxu0 %v157
    %230 = vmatprep.subr.mxu0 0.0
    %231 = vmatpush1.msra.mxu0 %v162
    %232 = vmatprep.subr.mxu0 0.0
    %233 = vmatpush1.msra.mxu0 %v167
    %234 = vmatprep.subr.mxu0 0.0
    %235 = vmatpush1.msra.mxu0 %v172
    %236 = vmatprep.subr.mxu0 0.0
    %237 = vmatpush1.msra.mxu0 %v177
    %238 = vmatprep.subr.mxu0 0.0
    %239 = vmatpush1.msra.mxu0 %v182
    %240 = vmatprep.subr.mxu0 0.0
    %241 = vmatpush1.msra.mxu0 %v187
    %242 = vmatprep.subr.mxu0 0.0
    %243 = vmatpush1.msra.mxu0 %v192
    %244 = vmatprep.subr.mxu0 0.0
    %245 = vmatpush1.msra.mxu0 0.0
    %246 = vmatprep.subr.mxu0 0.0
    %247 = vmatpush1.msra.mxu0 0.0
    %248 = vmatprep.subr.mxu0 0.0
    %249 = vmatpush1.msra.mxu0 0.0
    %250 = vmatprep.subr.mxu0 0.0
    %251 = vmatpush1.msra.mxu0 0.0
    %252 = vmatprep.subr.mxu0 0.0
    %253 = vmatpush1.msra.mxu0 0.0
    %254 = vmatprep.subr.mxu0 0.0
    %255 = vmatpush1.msra.mxu0 0.0
    %256 = vmatprep.subr.mxu0 0.0
    %257 = vmatpush1.msra.mxu0 0.0
    %258 = vmatprep.subr.mxu0 0.0
    %259 = vmatpush1.msra.mxu0 0.0
    %260 = vmatprep.subr.mxu0 0.0
    %261 = vmatpush1.msra.mxu0 0.0
    %262 = vmatprep.subr.mxu0 0.0
    %263 = vmatpush1.msra.mxu0 0.0
    %264 = vmatprep.subr.mxu0 0.0
    %265 = vmatpush1.msra.mxu0 0.0
    %266 = vmatprep.subr.mxu0 0.0
    %267 = vmatpush1.msra.mxu0 0.0
    %268 = vmatprep.subr.mxu0 0.0
    %269 = vmatpush1.msra.mxu0 0.0
    %270 = vmatprep.subr.mxu0 0.0
    %271 = vmatpush1.msra.mxu0 0.0
    %272 = vmatprep.subr.mxu0 0.0
    %273 = vmatpush1.msra.mxu0 0.0
    %274 = vmatprep.subr.mxu0 0.0
    %275 = vmatpush1.msra.mxu0 0.0
    %276 = vmatprep.subr.mxu0 0.0
    %277 = vmatpush1.msra.mxu0 0.0
    %278 = vmatprep.subr.mxu0 0.0
    %279 = vmatpush1.msra.mxu0 0.0
    %280 = vmatprep.subr.mxu0 0.0
    %281 = vmatpush1.msra.mxu0 0.0
    %282 = vmatprep.subr.mxu0 0.0
    %283 = vmatpush1.msra.mxu0 0.0
    %284 = vmatprep.subr.mxu0 0.0
    %285 = vmatpush1.msra.mxu0 0.0
    %286 = vmatprep.subr.mxu0 0.0
    %287 = vmatpush1.msra.mxu0 0.0
    %288 = vmatprep.subr.mxu0 0.0
    %289 = vmatpush1.msra.mxu0 0.0
    %290 = vmatprep.subr.mxu0 0.0
    %291 = vmatpush1.msra.mxu0 0.0
    %292 = vmatprep.mubr.f32.mxu0 0.0
    %293 = vmatmul.mubr.f32.gmra.mrb[0].mxu0 %v217
    %v294 = vpop.f32.mrb[0].mxu0
    %v295 = vadd.f32 %v204, %v294
    %v296 = vpop.f32.mrb[0].mxu0
    %297 = vmatprep.mubr.f32.mxu0 0.0
    %298 = vmatmul.mubr.f32.gmra.mrb[0].mxu0 %v220
    %v299 = vpop.f32.mrb[0].mxu0
    %v300 = vadd.f32 %v206, %v299
    %v301 = vpop.f32.mrb[0].mxu0
    %302 = vmatprep.mubr.f32.mxu0 0.0
    %303 = vmatmul.mubr.f32.gmra.mrb[0].mxu0 %v223
    %v304 = vpop.f32.mrb[0].mxu0
    %v305 = vadd.f32 %v208, %v304
    %v306 = vpop.f32.mrb[0].mxu0
    %307 = vmatprep.mubr.f32.mxu0 0.0
    %308 = vmatmul.mubr.f32.gmra.mrb[0].mxu0 %v226
    %v309 = vpop.f32.mrb[0].mxu0
    %v310 = vadd.f32 %v210, %v309
    %v311 = vpop.f32.mrb[0].mxu0
    %312 = vdwg.mxu0
    %v313 = vld [vmem:[%s4] sm:$0x1]
    %v315 = vlaneseq
    %v316 = vshrl.u32 %v315, 7
    %v317 = vsub.s32 0, %v316
    %v318 = vrot.slane %v313, %v317
    %v320 = vadd.f32 %v295, %v318
    %v321 = vadd.f32 %v300, %v318
    %v322 = vadd.f32 %v305, %v318
    %v323 = vadd.f32 %v310, %v318
    %v324 = vmax.f32 %v320, 0.0
    %v325 = vmax.f32 %v321, 0.0
    %v326 = vmax.f32 %v322, 0.0
    %v327 = vmax.f32 %v323, 0.0
    %v328 = vld [vmem:[%s5] sm:$0xff]
    %v329 = vld [vmem:[%s5 + $0x8] sm:$0xff]
    %v330 = vld [vmem:[%s5 + $0x10] sm:$0xff]
    %v331 = vld [vmem:[%s5 + $0x18] sm:$0xff]
    %v332 = vld [vmem:[%s5 + $0x20] sm:$0xff]
    %v333 = vld [vmem:[%s5 + $0x28] sm:$0xff]
    %v334 = vld [vmem:[%s5 + $0x30] sm:$0xff]
    %v335 = vld [vmem:[%s5 + $0x38] sm:$0xff]
    %vm336 = vcmask 261120
    %v338 = vsel %vm336, %v324, 0
    %v341 = vsel %vm336, %v325, 0
    %v344 = vsel %vm336, %v326, 0
    %v347 = vsel %vm336, %v327, 0
    %349 = vmatprep.subr.mxu0 %v329
    %350 = vmatpush1.msra.mxu0 %v328
    %351 = vmatprep.subr.mxu0 %v331
    %352 = vmatpush1.msra.mxu0 %v330
    %353 = vmatprep.subr.mxu0 %v333
    %354 = vmatpush1.msra.mxu0 %v332
    %355 = vmatprep.subr.mxu0 %v335
    %356 = vmatpush1.msra.mxu0 %v334
    %357 = vmatprep.subr.mxu0 0.0
    %358 = vmatpush1.msra.mxu0 0.0
    %359 = vmatprep.subr.mxu0 0.0
    %360 = vmatpush1.msra.mxu0 0.0
    %361 = vmatprep.subr.mxu0 0.0
    %362 = vmatpush1.msra.mxu0 0.0
    %363 = vmatprep.subr.mxu0 0.0
    %364 = vmatpush1.msra.mxu0 0.0
    %365 = vmatprep.subr.mxu0 0.0
    %366 = vmatpush1.msra.mxu0 0.0
    %367 = vmatprep.subr.mxu0 0.0
    %368 = vmatpush1.msra.mxu0 0.0
    %369 = vmatprep.subr.mxu0 0.0
    %370 = vmatpush1.msra.mxu0 0.0
    %371 = vmatprep.subr.mxu0 0.0
    %372 = vmatpush1.msra.mxu0 0.0
    %373 = vmatprep.subr.mxu0 0.0
    %374 = vmatpush1.msra.mxu0 0.0
    %375 = vmatprep.subr.mxu0 0.0
    %376 = vmatpush1.msra.mxu0 0.0
    %377 = vmatprep.subr.mxu0 0.0
    %378 = vmatpush1.msra.mxu0 0.0
    %379 = vmatprep.subr.mxu0 0.0
    %380 = vmatpush1.msra.mxu0 0.0
    %381 = vmatprep.subr.mxu0 0.0
    %382 = vmatpush1.msra.mxu0 0.0
    %383 = vmatprep.subr.mxu0 0.0
    %384 = vmatpush1.msra.mxu0 0.0
    %385 = vmatprep.subr.mxu0 0.0
    %386 = vmatpush1.msra.mxu0 0.0
    %387 = vmatprep.subr.mxu0 0.0
    %388 = vmatpush1.msra.mxu0 0.0
    %389 = vmatprep.subr.mxu0 0.0
    %390 = vmatpush1.msra.mxu0 0.0
    %391 = vmatprep.subr.mxu0 0.0
    %392 = vmatpush1.msra.mxu0 0.0
    %393 = vmatprep.subr.mxu0 0.0
    %394 = vmatpush1.msra.mxu0 0.0
    %395 = vmatprep.subr.mxu0 0.0
    %396 = vmatpush1.msra.mxu0 0.0
    %397 = vmatprep.subr.mxu0 0.0
    %398 = vmatpush1.msra.mxu0 0.0
    %399 = vmatprep.subr.mxu0 0.0
    %400 = vmatpush1.msra.mxu0 0.0
    %401 = vmatprep.subr.mxu0 0.0
    %402 = vmatpush1.msra.mxu0 0.0
    %403 = vmatprep.subr.mxu0 0.0
    %404 = vmatpush1.msra.mxu0 0.0
    %405 = vmatprep.subr.mxu0 0.0
    %406 = vmatpush1.msra.mxu0 0.0
    %407 = vmatprep.subr.mxu0 0.0
    %408 = vmatpush1.msra.mxu0 0.0
    %409 = vmatprep.subr.mxu0 0.0
    %410 = vmatpush1.msra.mxu0 0.0
    %411 = vmatprep.subr.mxu0 0.0
    %412 = vmatpush1.msra.mxu0 0.0
    %413 = vmatprep.mubr.f32.mxu0 0.0
    %414 = vmatmul.mubr.f32.gmra.mrb[0].mxu0 %v338
    %v415 = vpop.f32.mrb[0].mxu0
    %v416 = vadd.f32 0.0, %v415
    %v417 = vpop.f32.mrb[0].mxu0
    %v418 = vadd.f32 0.0, %v417
    %419 = vmatprep.mubr.f32.mxu0 0.0
    %420 = vmatmul.mubr.f32.gmra.mrb[0].mxu0 %v341
    %v421 = vpop.f32.mrb[0].mxu0
    %v422 = vadd.f32 0.0, %v421
    %v423 = vpop.f32.mrb[0].mxu0
    %v424 = vadd.f32 0.0, %v423
    %425 = vmatprep.mubr.f32.mxu0 0.0
    %426 = vmatmul.mubr.f32.gmra.mrb[0].mxu0 %v344
    %v427 = vpop.f32.mrb[0].mxu0
    %v428 = vadd.f32 0.0, %v427
    %v429 = vpop.f32.mrb[0].mxu0
    %430 = vmatprep.mubr.f32.mxu0 0.0
    %431 = vmatmul.mubr.f32.gmra.mrb[0].mxu0 %v347
    %v432 = vpop.f32.mrb[0].mxu0
    %v433 = vadd.f32 0.0, %v432
    %v434 = vpop.f32.mrb[0].mxu0
    %435 = vdwg.mxu0
    %v436 = vld [vmem:[#allocation2] sm:$0xff]
    %v437 = vld [vmem:[#allocation2 + $0x8] sm:$0xff]
    %v439 = vsel %vm336, %v436, 0
    %v442 = vsel %vm336, %v437, 0
    %444 = vmatprep.subr.mxu0 0.0
    %445 = vmatpush1.msra.mxu0 %v416
    %446 = vmatprep.subr.mxu0 0.0
    %447 = vmatpush1.msra.mxu0 %v422
    %448 = vmatprep.subr.mxu0 0.0
    %449 = vmatpush1.msra.mxu0 %v428
    %450 = vmatprep.subr.mxu0 0.0
    %451 = vmatpush1.msra.mxu0 %v433
    %452 = vmatprep.subr.mxu0 0.0
    %453 = vmatpush1.msra.mxu0 0.0
    %454 = vmatprep.subr.mxu0 0.0
    %455 = vmatpush1.msra.mxu0 0.0
    %456 = vmatprep.subr.mxu0 0.0
    %457 = vmatpush1.msra.mxu0 0.0
    %458 = vmatprep.subr.mxu0 0.0
    %459 = vmatpush1.msra.mxu0 0.0
    %460 = vmatprep.subr.mxu0 0.0
    %461 = vmatpush1.msra.mxu0 0.0
    %462 = vmatprep.subr.mxu0 0.0
    %463 = vmatpush1.msra.mxu0 0.0
    %464 = vmatprep.subr.mxu0 0.0
    %465 = vmatpush1.msra.mxu0 0.0
    %466 = vmatprep.subr.mxu0 0.0
    %467 = vmatpush1.msra.mxu0 0.0
    %468 = vmatprep.subr.mxu0 0.0
    %469 = vmatpush1.msra.mxu0 0.0
    %470 = vmatprep.subr.mxu0 0.0
    %471 = vmatpush1.msra.mxu0 0.0
    %472 = vmatprep.subr.mxu0 0.0
    %473 = vmatpush1.msra.mxu0 0.0
    %474 = vmatprep.subr.mxu0 0.0
    %475 = vmatpush1.msra.mxu0 0.0
    %476 = vmatprep.subr.mxu0 0.0
    %477 = vmatpush1.msra.mxu0 0.0
    %478 = vmatprep.subr.mxu0 0.0
    %479 = vmatpush1.msra.mxu0 0.0
    %480 = vmatprep.subr.mxu0 0.0
    %481 = vmatpush1.msra.mxu0 0.0
    %482 = vmatprep.subr.mxu0 0.0
    %483 = vmatpush1.msra.mxu0 0.0
    %484 = vmatprep.subr.mxu0 0.0
    %485 = vmatpush1.msra.mxu0 0.0
    %486 = vmatprep.subr.mxu0 0.0
    %487 = vmatpush1.msra.mxu0 0.0
    %488 = vmatprep.subr.mxu0 0.0
    %489 = vmatpush1.msra.mxu0 0.0
    %490 = vmatprep.subr.mxu0 0.0
    %491 = vmatpush1.msra.mxu0 0.0
    %492 = vmatprep.subr.mxu0 0.0
    %493 = vmatpush1.msra.mxu0 0.0
    %494 = vmatprep.subr.mxu0 0.0
    %495 = vmatpush1.msra.mxu0 0.0
    %496 = vmatprep.subr.mxu0 0.0
    %497 = vmatpush1.msra.mxu0 0.0
    %498 = vmatprep.subr.mxu0 0.0
    %499 = vmatpush1.msra.mxu0 0.0
    %500 = vmatprep.subr.mxu0 0.0
    %501 = vmatpush1.msra.mxu0 0.0
    %502 = vmatprep.subr.mxu0 0.0
    %503 = vmatpush1.msra.mxu0 0.0
    %504 = vmatprep.subr.mxu0 0.0
    %505 = vmatpush1.msra.mxu0 0.0
    %506 = vmatprep.subr.mxu0 0.0
    %507 = vmatpush1.msra.mxu0 0.0
    %508 = vmatprep.mubr.f32.mxu0 0.0
    %509 = vmatmul.mubr.f32.gmra.mrb[0].mxu0 %v439
    %v510 = vpop.f32.mrb[0].mxu0
    %v511 = vadd.f32 %v418, %v510
    %v512 = vpop.f32.mrb[0].mxu0
    %513 = vmatprep.mubr.f32.mxu0 0.0
    %514 = vmatmul.mubr.f32.gmra.mrb[0].mxu0 %v442
    %v515 = vpop.f32.mrb[0].mxu0
    %v516 = vadd.f32 %v424, %v515
    %v517 = vpop.f32.mrb[0].mxu0
    %518 = vdwg.mxu0
    %v519 = vld [vmem:[%s6] sm:$0x1]
    %v521 = vlaneseq
    %v522 = vshrl.u32 %v521, 7
    %v523 = vsub.s32 0, %v522
    %v524 = vrot.slane %v519, %v523
    %v526 = vadd.f32 %v511, %v524
    %v527 = vadd.f32 %v516, %v524
    %528 = vst [vmem:[#allocation7] sm:$0xff] %v526
    %529 = vst [vmem:[#allocation7 + $0x8] sm:$0xff] %v527
    // Predicated region
    $region38: #{tpu_custom_call.1} parent=1 // pred_check
      _
    $region39: #{tpu_custom_call.1} parent=1 // pred_check_branch
      %531 = sbr.rel (0) target = $region41
    $region40: #{tpu_custom_call.1} parent=1 // pred_region
      %s533 = ssub.s32 256, 256
      %534 = vsyncadd [#allocation4], %s533
      %s535 = sshll.u32 [#allocation7], 4
      %s536 = int_to_ptr.vmem [resolvable:$true] %s535
      %541 = dma.vmem_to_hbm [thread:$0]  %s536, 256, %s7, [#allocation4], 128, 128, 8
    $region41: #{tpu_custom_call.1} parent=1 // pred_fallthru
      _
    // Predicated region
    $region42: #{tpu_custom_call.1} parent=1 // pred_check
      _
    $region43: #{tpu_custom_call.1} parent=1 // pred_check_branch
      %543 = sbr.rel (0) target = $region45
    $region44: #{tpu_custom_call.1} parent=1 // pred_region
      %544 = dma.done [#allocation4], 256
    $region45: #{tpu_custom_call.1} parent=1 // pred_fallthru
      _
    %545 = vsyncpa [#allocation3], 1
    %546 = vsyncpa [#allocation6], 1
    %547 = vsyncpa [#allocation4], 1

</llo_original>
